<compile_context>
chip_gen: v5e
topology: v5e:2x2
jax: 0.10.0
libtpu: 0.0.40
codegen_flags: <defaults>
</compile_context>

<pallas_src>
import functools

import jax
import jax.numpy as jnp
from jax.experimental import pallas as pl
from jax.experimental.pallas import tpu as pltpu


def _rmsnorm_kernel(x_ref, w_ref, o_ref, *, eps: float, exact_type_as: bool):
    # x.float()
    x = x_ref[...].astype(jnp.float32)
    # mean of squares over last dim, keepdim
    ms = jnp.mean(x * x, axis=-1, keepdims=True)
    # x * rsqrt(ms + eps)   (rsqrt goes to the EUP -> free slot, kernel is mem-bound)
    normed = x * jax.lax.rsqrt(ms + eps)
    if exact_type_as:
        # Match torch `.type_as(x)` before the weight multiply (bit-exact for bf16).
        # For f32 inputs these casts are no-ops.
        normed = normed.astype(x_ref.dtype).astype(jnp.float32)
    w = w_ref[...].astype(jnp.float32)
    # output * weight, in the promoted output dtype (torch promotion semantics)
    o_ref[...] = (normed * w).astype(o_ref.dtype)


def _pick_block_rows(rows: int, dim: int, x_itemsize: int, out_itemsize: int,
                     block_rows=None):
    """Choose a row tile that (a) is sublane-pack aligned, (b) fits a VMEM
    budget safe on v5e/v6e (128 MiB) and v7x (64 MiB), and (c) leaves >=4 grid
    steps when there is enough work so both v7x TensorCores get rows."""
    pack = max(1, 4 // x_itemsize)      # 1 for f32, 2 for bf16, 4 for int8/fp8
    align = 8 * pack                    # keep loads/stores sublane-dense

    # VMEM per block row: double-buffered input + output tiles, plus headroom
    # for the f32 intermediates the kernel materializes over the block.
    per_row_bytes = dim * (2 * x_itemsize + 2 * out_itemsize + 3 * 4)
    budget = 40 * 1024 * 1024           # conservative across v5e/v6e/v7x

    if block_rows is None:
        tm = max(align, (budget // per_row_bytes) // align * align)
    else:
        tm = max(align, pl.cdiv(block_rows, align) * align)

    # Keep the row grid >= 4 steps when rows allow (megacore sharding on v7x;
    # ~neutral on single-TC v5e/v6e).
    if rows >= 8 * align:
        tm = min(tm, max(align, (rows // 4) // align * align))

    # Never bigger than the (padded) row count.
    tm = min(tm, pl.cdiv(rows, align) * align)
    return tm, per_row_bytes


def rmsnorm(x: jax.Array, weight: jax.Array, eps: float = 1e-6, *,
            block_rows: int | None = None, exact_type_as: bool = True):
    """RMSNorm over the last axis of x, scaled by `weight` (shape [dim])."""
    orig_shape = x.shape
    dim = orig_shape[-1]
    assert weight.shape == (dim,)

    rows = 1
    for s in orig_shape[:-1]:
        rows *= s
    x2d = x.reshape(rows, dim)
    w2d = weight.reshape(1, dim)

    # output dtype follows torch promotion: (x dtype) * (weight dtype)
    out_dtype = jnp.promote_types(x.dtype, weight.dtype)
    x_itemsize = jnp.dtype(x.dtype).itemsize
    out_itemsize = jnp.dtype(out_dtype).itemsize

    tm, per_row_bytes = _pick_block_rows(rows, dim, x_itemsize, out_itemsize,
                                         block_rows)

    # Pad rows up to a multiple of tm instead of asserting divisibility.
    # Zero rows normalize to finite values (rsqrt(eps)), so no NaNs are produced.
    padded_rows = pl.cdiv(rows, tm) * tm
    if padded_rows != rows:
        x2d = jnp.pad(x2d, ((0, padded_rows - rows), (0, 0)))

    grid = (padded_rows // tm,)

    grid_spec = pltpu.PrefetchScalarGridSpec(
        num_scalar_prefetch=0,
        grid=grid,
        in_specs=[
            pl.BlockSpec((tm, dim), lambda i: (i, 0)),   # x tile
            pl.BlockSpec((1, dim), lambda i: (0, 0)),    # weight: fetched once, resident
        ],
        out_specs=pl.BlockSpec((tm, dim), lambda i: (i, 0)),
    )

    # Raise scoped VMEM above the default when the large tiles need it,
    # staying well under v7x's 64 MiB physical VMEM.
    vmem_limit = int(min(max(per_row_bytes * tm + (2 << 20), 16 << 20), 56 << 20))

    cost = pl.CostEstimate(
        flops=4 * rows * dim,
        transcendentals=rows,
        bytes_accessed=rows * dim * (x_itemsize + out_itemsize)
        + dim * jnp.dtype(weight.dtype).itemsize,
    )

    out2d = pl.pallas_call(
        functools.partial(_rmsnorm_kernel, eps=eps, exact_type_as=exact_type_as),
        out_shape=jax.ShapeDtypeStruct((padded_rows, dim), out_dtype),
        grid_spec=grid_spec,
        compiler_params=pltpu.CompilerParams(
            dimension_semantics=("parallel",),
            vmem_limit_bytes=vmem_limit,
        ),
        cost_estimate=cost,
    )(x2d, w2d)

    if padded_rows != rows:
        out2d = out2d[:rows]
    return out2d.reshape(orig_shape[:-1] + (dim,))


def _rmsnorm_ref(x, w, eps=1e-6):
    xf = x.astype(jnp.float32)
    normed = xf * jax.lax.rsqrt(jnp.mean(xf * xf, axis=-1, keepdims=True) + eps)
    normed = normed.astype(x.dtype)
    out_dtype = jnp.promote_types(x.dtype, w.dtype)
    return (normed.astype(jnp.float32) * w.astype(jnp.float32)).astype(out_dtype)


if __name__ == "__main__":
    key = jax.random.PRNGKey(0)
    batch, seq, hidden = 2, 8, 32

    x = jax.random.normal(key, (batch, seq, hidden), dtype=jnp.float32)
    # Deterministic parameter init: RMSNorm.__init__ sets weight = ones(dim)
    weight = jnp.ones((hidden,), dtype=jnp.float32)

    out = rmsnorm(x, weight, eps=1e-6)
    jax.block_until_ready(out)

    ref = _rmsnorm_ref(x, weight, eps=1e-6)
    assert out.shape == ref.shape and out.dtype == ref.dtype
    assert jnp.allclose(out, ref, atol=1e-5, rtol=1e-5)

    # Exercise the padding path (rows not a multiple of the tile) + bf16 packing.
    x2 = jax.random.normal(jax.random.PRNGKey(1), (3, 5, hidden),
                           dtype=jnp.bfloat16)
    out2 = rmsnorm(x2, weight, eps=1e-6)
    jax.block_until_ready(out2)
    ref2 = _rmsnorm_ref(x2, weight, eps=1e-6)
    assert out2.shape == ref2.shape and out2.dtype == ref2.dtype
    assert jnp.allclose(out2.astype(jnp.float32), ref2.astype(jnp.float32),
                        atol=1e-2, rtol=1e-2)

    print("KERNEL_OK")
</pallas_src>

<mosaic_0001>
module attributes {stable_mosaic.version = 11 : i64} {
  func.func @_rmsnorm_kernel(%arg0: i32, %arg1: memref<16x32xf32, #tpu.memory_space<vmem>>, %arg2: memref<1x32xf32, #tpu.memory_space<vmem>>, %arg3: memref<16x32xf32, #tpu.memory_space<vmem>>) attributes {dimension_semantics = [#tpu.dimension_semantics<parallel>], iteration_bounds = array<i64: 1>, scalar_prefetch = 0 : i64, scratch_operands = 0 : i64, tpu.core_type = #tpu.core_type<tc>, window_params = [{transform_indices = @transform_0, window_bounds = array<i64: 16, 32>}, {pipeline_mode = #tpu.pipeline_mode<synchronous>, transform_indices = @transform_1, window_bounds = array<i64: 1, 32>}, {transform_indices = @transform_2, window_bounds = array<i64: 16, 32>}]} {
    %c0 = arith.constant 0 : index
    %c0_0 = arith.constant 0 : index
    %0 = vector.load %arg1[%c0, %c0_0] : memref<16x32xf32, #tpu.memory_space<vmem>>, vector<16x32xf32>
    %1 = arith.mulf %0, %0 : vector<16x32xf32>
    %cst = arith.constant dense<0.000000e+00> : vector<16xf32>
    %2 = vector.multi_reduction <add>, %1, %cst [1] : vector<16x32xf32> to vector<16xf32>
    %3 = vector.shape_cast %2 : vector<16xf32> to vector<16x1xf32>
    %cst_1 = arith.constant 3.200000e+01 : f32
    %4 = vector.broadcast %cst_1 : f32 to vector<16x1xf32>
    %5 = arith.divf %3, %4 : vector<16x1xf32>
    %cst_2 = arith.constant 9.99999997E-7 : f32
    %6 = vector.broadcast %cst_2 : f32 to vector<16x1xf32>
    %7 = arith.addf %5, %6 : vector<16x1xf32>
    %8 = math.rsqrt %7 : vector<16x1xf32>
    %9 = vector.broadcast %8 : vector<16x1xf32> to vector<16x32xf32>
    %10 = arith.mulf %0, %9 : vector<16x32xf32>
    %c0_3 = arith.constant 0 : index
    %c0_4 = arith.constant 0 : index
    %11 = vector.load %arg2[%c0_3, %c0_4] : memref<1x32xf32, #tpu.memory_space<vmem>>, vector<1x32xf32>
    %12 = vector.broadcast %11 : vector<1x32xf32> to vector<16x32xf32>
    %13 = arith.mulf %10, %12 : vector<16x32xf32>
    %c0_5 = arith.constant 0 : index
    %c0_6 = arith.constant 0 : index
    %14 = vector.load %arg3[%c0_5, %c0_6] : memref<16x32xf32, #tpu.memory_space<vmem>>, vector<16x32xf32>
    tpu.vector_store %arg3[%c0_5, %c0_6], %13 {strides = array<i32>} : memref<16x32xf32, #tpu.memory_space<vmem>>, vector<16x32xf32>,
    return
  }
  func.func @transform_0(%arg0: i32) -> (i32, i32) {
    %c0_i32 = arith.constant 0 : i32
    %c0_i32_0 = arith.constant 0 : i32
    return %arg0, %c0_i32 : i32, i32
  }
  func.func @transform_1(%arg0: i32) -> (i32, i32) {
    %c0_i32 = arith.constant 0 : i32
    %c0_i32_0 = arith.constant 0 : i32
    %c0_i32_1 = arith.constant 0 : i32
    return %c0_i32, %c0_i32_0 : i32, i32
  }
  func.func @transform_2(%arg0: i32) -> (i32, i32) {
    %c0_i32 = arith.constant 0 : i32
    %c0_i32_0 = arith.constant 0 : i32
    return %arg0, %c0_i32 : i32, i32
  }
}

</mosaic_0001>

<llo_original>
// kernel: tpu_custom_call.1
$region0: #{tpu_custom_call.1}
  #allocation0 [shape = 'u32[]', space=smem, size = 0x4, offset = 0x4, fixed_abs, tag = 'smem constant byte address 0x4 - core index']
  #allocation1 [shape = 'u32[72,128]{1,0:T(1,128)}', space=vmem, size = 0x9000, scoped, tag = 'internal scratch']
  %s0 = inlined_call_operand.hbm [shape: f32[16,32], index: 0, kind: input, shape index: {}]
  %s1 = inlined_call_operand.hbm [shape: f32[1,32], index: 1, kind: input, shape index: {}]
  %s2 = inlined_call_operand.hbm [shape: f32[16,32], index: 2, kind: output, shape index: {}]
  %s3 = sld [smem:[#allocation0]]
  $region26: #{tpu_custom_call.1} parent=0
    _
  %s5 = ssub.s32 1, %s3
  %s6 = scalar_select 0, %s5, %s3
  $region1: #{tpu_custom_call.1} parent=0
    #allocation2 [shape = 'u8[8192]{0}', space=vmem, size = 0x2000, scoped, tag = 'input window, operand 0, single buffered']
    #allocation3 [shape = 's32[1]{0}', space=sflag, size = 0x4, scoped, tag = 'scoped memory for tpu_custom_call.1']
    #allocation4 [shape = 's32[1]{0}', space=sflag, size = 0x4, scoped, tag = 'scoped memory for tpu_custom_call.1']
    #allocation5 [shape = 'u8[512]{0}', space=vmem, size = 0x400, scoped, tag = 'input window, operand 1, single buffered']
    #allocation6 [shape = 's32[1]{0}', space=sflag, size = 0x4, scoped, tag = 'scoped memory for tpu_custom_call.1']
    #allocation7 [shape = 'u8[8192]{0}', space=vmem, size = 0x2000, scoped, tag = 'output window, operand 0, single buffered']
    %7 = vsyncpa [#allocation3], 0
    %8 = vsyncpa [#allocation6], 0
    %9 = vsyncpa [#allocation4], 0
    // Predicated region
    $region2: #{tpu_custom_call.1} parent=1 // pred_check
      _
    $region3: #{tpu_custom_call.1} parent=1 // pred_check_branch
      %11 = sbr.rel (0) target = $region5
    $region4: #{tpu_custom_call.1} parent=1 // pred_region
      %13 = vsyncadd [#allocation3], 0
      %s14 = sshll.u32 %s0, 4
      %s15 = int_to_ptr.hbm [resolvable:$true] %s14
      %s16 = sshll.u32 [#allocation2], 4
      %s17 = int_to_ptr.vmem [resolvable:$true] %s16
      %22 = dma.hbm_to_vmem [thread:$0]  %s15, 256, %s17, [#allocation3], 128, 128, 8
    $region5: #{tpu_custom_call.1} parent=1 // pred_fallthru
      _
    // Predicated region
    $region6: #{tpu_custom_call.1} parent=1 // pred_check
      _
    $region7: #{tpu_custom_call.1} parent=1 // pred_check_branch
      %24 = sbr.rel (0) target = $region9
    $region8: #{tpu_custom_call.1} parent=1 // pred_region
      %26 = vsyncadd [#allocation6], 0
      %s28 = sshll.u32 %s1, 4
      %s29 = int_to_ptr.hbm [resolvable:$true] %s28
      %s30 = sshll.u32 [#allocation5], 4
      %s31 = int_to_ptr.vmem [resolvable:$true] %s30
      %33 = dma.hbm_to_vmem [thread:$0]  %s29, 16, %s31, [#allocation6]
    $region9: #{tpu_custom_call.1} parent=1 // pred_fallthru
      _
    // Predicated region
    $region10: #{tpu_custom_call.1} parent=1 // pred_check
      _
    $region11: #{tpu_custom_call.1} parent=1 // pred_check_branch
      %35 = sbr.rel (0) target = $region13
    $region12: #{tpu_custom_call.1} parent=1 // pred_region
      %37 = dma.done [#allocation3], 256
    $region13: #{tpu_custom_call.1} parent=1 // pred_fallthru
      _
    // Predicated region
    $region14: #{tpu_custom_call.1} parent=1 // pred_check
      _
    $region15: #{tpu_custom_call.1} parent=1 // pred_check_branch
      %39 = sbr.rel (0) target = $region17
    $region16: #{tpu_custom_call.1} parent=1 // pred_region
      %41 = dma.done [#allocation6], 16
    $region17: #{tpu_custom_call.1} parent=1 // pred_fallthru
      _
    %v42 = vld [vmem:[#allocation2] sm:$0xff]
    %v43 = vld [vmem:[#allocation2 + $0x8] sm:$0xff]
    %v44 = vmul.f32 %v42, %v42
    %v45 = vmul.f32 %v43, %v43
    %vm46 = vcmask 261120
    %v47 = vsel %vm46, %v44, 0.0
    %48 = vadd.xlane.f32.xlu0 %v47
    %v49 = vpop.xlane.xlu0 %48
    %v50 = vsel %vm46, %v45, 0.0
    %51 = vadd.xlane.f32.xlu0 %v50
    %v52 = vpop.xlane.xlu0 %51
    %v53 = vrcp.pop 32.0
    %v54 = vmul.f32 32.0, %v53
    %v55 = vsub.f32 1.0, %v54
    %v56 = vmul.f32 %v53, %v55
    %v57 = vadd.f32 %v53, %v56
    %vm58 = vweird.f32 %v53
    %v59 = vsel %vm58, %v53, %v57
    %v60 = vmul.f32 %v49, %v59
    %v61 = vmul.f32 %v52, %v59
    %v62 = vadd.f32 %v60, 1e-06
    %v63 = vadd.f32 %v61, 1e-06
    %v64 = vrsqrt.pop %v62
    %v65 = vmul.f32 %v64, %v62
    %v66 = vmul.f32 %v65, %v64
    %v67 = vmul.f32 0.5, %v66
    %v68 = vsub.f32 1.5, %v67
    %v69 = vmul.f32 %v64, %v68
    %vm70 = vweird.f32 %v62
    %vm71 = vweird.f32 %v64
    %vm72 = vmor %vm70, %vm71
    %v73 = vsel %vm72, %v64, %v69
    %v74 = vrsqrt.pop %v63
    %v75 = vmul.f32 %v74, %v63
    %v76 = vmul.f32 %v75, %v74
    %v77 = vmul.f32 0.5, %v76
    %v78 = vsub.f32 1.5, %v77
    %v79 = vmul.f32 %v74, %v78
    %vm80 = vweird.f32 %v63
    %vm81 = vweird.f32 %v74
    %vm82 = vmor %vm80, %vm81
    %v83 = vsel %vm82, %v74, %v79
    %v84 = vmul.f32 %v42, %v73
    %v85 = vmul.f32 %v43, %v83
    %v86 = vld [vmem:[#allocation5] sm:$0x1]
    %v88 = vperm.slane %v86, 0
    %v90 = vmul.f32 %v84, %v88
    %v91 = vmul.f32 %v85, %v88
    %92 = vst.msk [vmem:[#allocation7] sm:$0xff] %vm46, %v90
    %93 = vst.msk [vmem:[#allocation7 + $0x8] sm:$0xff] %vm46, %v91
    // Predicated region
    $region18: #{tpu_custom_call.1} parent=1 // pred_check
      _
    $region19: #{tpu_custom_call.1} parent=1 // pred_check_branch
      %95 = sbr.rel (0) target = $region21
    $region20: #{tpu_custom_call.1} parent=1 // pred_region
      %97 = vsyncadd [#allocation4], 0
      %s98 = sshll.u32 [#allocation7], 4
      %s99 = int_to_ptr.vmem [resolvable:$true] %s98
      %s100 = sshll.u32 %s2, 4
      %s101 = int_to_ptr.hbm [resolvable:$true] %s100
      %106 = dma.vmem_to_hbm [thread:$0]  %s99, 256, %s101, [#allocation4], 128, 128, 8
    $region21: #{tpu_custom_call.1} parent=1 // pred_fallthru
      _
    // Predicated region
    $region22: #{tpu_custom_call.1} parent=1 // pred_check
      _
    $region23: #{tpu_custom_call.1} parent=1 // pred_check_branch
      %108 = sbr.rel (0) target = $region25
    $region24: #{tpu_custom_call.1} parent=1 // pred_region
      %110 = dma.done [#allocation4], 256
    $region25: #{tpu_custom_call.1} parent=1 // pred_fallthru
      _
    %111 = vsyncpa [#allocation3], 1
    %112 = vsyncpa [#allocation6], 1
    %113 = vsyncpa [#allocation4], 1

</llo_original>
